<compile_context>
chip_gen: v6e
topology: v6e:2x2x1
jax: 0.10.0
libtpu: 0.0.40
codegen_flags: <defaults>
</compile_context>

<pallas_src>
import jax
import jax.numpy as jnp
from jax.experimental import pallas as pl
from jax.experimental.pallas import tpu as pltpu

CHUNK = 512            # rows per inner step == output lane width (multiple of 128)
ROW_TILE_MAX = 16384   # max batch rows per grid step (~8 MiB x-block incl. lane padding)
MIN_SPLIT_TILE = 8192  # don't shrink tiles below this just to create more grid blocks


def _round_up(v, m):
    return ((v + m - 1) // m) * m


def _mlp_diff_kernel(x_ref, w1t_ref, b1_ref, wd_ref, bd_ref, o_ref):
    """One grid step: rows of x -> (logits[:,1] - logits[:,0]), laid out lane-dense.

    x_ref  : (TM, F)        input rows (batch in sublanes, features in lanes)
    w1t_ref: (H, F)         first-layer weight, transposed (W1^T)
    b1_ref : (H, 1)         first-layer bias as a column
    wd_ref : (H, 1)         folded second layer: w2[:,1] - w2[:,0]
    bd_ref : (1, 1)         folded second-layer bias: b2[1] - b2[0]
    o_ref  : (TM//C, C)     output; sample s of this tile lands at [s // C, s % C]
    """
    w1t = w1t_ref[...]                                  # matches x dtype (f32 or bf16)
    b1c = b1_ref[...].astype(jnp.float32)
    wdc = wd_ref[...].astype(jnp.float32)
    bd = bd_ref[...].astype(jnp.float32)

    n_chunks, chunk = o_ref.shape

    def body(c, carry):
        r0 = pl.multiple_of(c * chunk, chunk)
        x_c = x_ref[pl.ds(r0, chunk), :]                # (C, F)
        # hT[m, j] = sum_k W1[k, m] * x_c[j, k]  -> hidden transposed: batch in lanes.
        h_t = jax.lax.dot_general(
            w1t, x_c, (((1,), (1,)), ((), ())),
            preferred_element_type=jnp.float32,
        )                                               # (H, C), f32 accumulation
        h_t = jnp.maximum(h_t + b1c, 0.0)
        # Folded layer-2 + class difference: VPU multiply + cross-sublane (XLU) reduce.
        row = jnp.sum(wdc * h_t, axis=0, keepdims=True) + bd   # (1, C)
        o_ref[pl.ds(c, 1), :] = row.astype(o_ref.dtype)
        return carry

    jax.lax.fori_loop(0, n_chunks, body, 0)


def _run_tiles(x2d, w1t, b1c, wdc, bd, *, tm, n_rows):
    """Run the kernel over the first `n_rows` rows of x2d (n_rows % tm == 0, no copy)."""
    n_feat = x2d.shape[1]
    hidden = w1t.shape[0]
    n_blocks = n_rows // tm
    rows_per_blk = tm // CHUNK

    out = pl.pallas_call(
        _mlp_diff_kernel,
        out_shape=jax.ShapeDtypeStruct((n_blocks * rows_per_blk, CHUNK), jnp.float32),
        grid=(n_blocks,),
        in_specs=[
            pl.BlockSpec((tm, n_feat), lambda i: (i, 0)),       # streamed x tiles
            pl.BlockSpec((hidden, n_feat), lambda i: (0, 0)),   # resident W1^T
            pl.BlockSpec((hidden, 1), lambda i: (0, 0)),        # resident b1
            pl.BlockSpec((hidden, 1), lambda i: (0, 0)),        # resident w_diff
            pl.BlockSpec((1, 1), lambda i: (0, 0)),             # resident b_diff
        ],
        out_specs=pl.BlockSpec((rows_per_blk, CHUNK), lambda i: (i, 0)),
        compiler_params=pltpu.CompilerParams(
            dimension_semantics=("parallel",),   # batch tiles shard across TCs on v7x
            vmem_limit_bytes=48 << 20,           # headroom-safe on v7x's 64 MiB VMEM
        ),
    )(x2d, w1t, b1c, wdc, bd)
    return out.reshape(-1)                       # (n_rows,) in batch order


def wrapper_forward(x, w1, b1, w2, b2, *, tm_max=ROW_TILE_MAX):
    """(logits[:,1] - logits[:,0])[:, None] with logits = relu(flat(x) @ w1 + b1) @ w2 + b2.

    w1: (in_features, hidden), w2: (hidden, 2) -- "math" layout.  NOTE: raw PyTorch
    nn.Linear.weight is (out_features, in_features); transpose it at weight-load time.
    """
    n = x.shape[0]
    if n == 0:
        return jnp.zeros((0, 1), jnp.float32)

    x_flat = x.reshape(n, -1)                    # free, contiguous; keep caller's dtype
    n_feat = x_flat.shape[1]
    hidden = w1.shape[1]

    # Fold weights once (tiny, outside the kernel).
    w1t = jnp.asarray(w1, x_flat.dtype).T                            # (hidden, n_feat)
    b1c = jnp.asarray(b1, jnp.float32).reshape(hidden, 1)
    wdc = (w2[:, 1] - w2[:, 0]).astype(jnp.float32).reshape(hidden, 1)
    bd = (b2[1] - b2[0]).astype(jnp.float32).reshape(1, 1)

    assert tm_max % CHUNK == 0 and tm_max >= CHUNK
    # Row-tile size: large enough to amortize per-grid-step overhead, >= 2 tiles once the
    # batch is big (two v7x TensorCores), capped by tm_max / VMEM.
    n_aligned = _round_up(n, CHUNK)
    tm_balanced = _round_up(-(-n // 8), CHUNK)
    tm = min(tm_max, max(tm_balanced, min(n_aligned, MIN_SPLIT_TILE)))

    n_main = (n // tm) * tm
    pieces = []
    if n_main > 0:
        # Bulk of the batch streams straight from the caller's array: no pad, no copy.
        pieces.append(_run_tiles(x_flat, w1t, b1c, wdc, bd, tm=tm, n_rows=n_main))
    if n > n_main:
        # Remainder (< tm rows): pad a small slice up to a CHUNK multiple (cheap).
        tail = n - n_main
        tm_tail = _round_up(tail, CHUNK)
        x_tail = jnp.pad(x_flat[n_main:], ((0, tm_tail - tail), (0, 0)))
        pieces.append(
            _run_tiles(x_tail, w1t, b1c, wdc, bd, tm=tm_tail, n_rows=tm_tail)[:tail]
        )
    flat = pieces[0] if len(pieces) == 1 else jnp.concatenate(pieces)
    return flat.reshape(n, 1)


def _reference(x, w1, b1, w2, b2):
    xf = x.reshape(x.shape[0], -1)
    logits = jnp.maximum(xf @ w1 + b1, 0.0) @ w2 + b2
    return (logits[:, 1] - logits[:, 0])[:, None]


if __name__ == "__main__":
    key = jax.random.PRNGKey(0)
    k_x, k_w1, k_b1, k_w2, k_b2, k_big = jax.random.split(key, 6)

    batch, channels, length, hidden, n_classes = 2, 4, 16, 32, 2
    in_features = channels * length

    x = jax.random.normal(k_x, (batch, channels, length), dtype=jnp.float32)
    w1 = jax.random.normal(k_w1, (in_features, hidden), dtype=jnp.float32) * 0.1
    b1 = jax.random.normal(k_b1, (hidden,), dtype=jnp.float32) * 0.1
    w2 = jax.random.normal(k_w2, (hidden, n_classes), dtype=jnp.float32) * 0.1
    b2 = jax.random.normal(k_b2, (n_classes,), dtype=jnp.float32) * 0.1

    # Small-batch path (single 512-row tile).
    out = wrapper_forward(x, w1, b1, w2, b2)
    out = jax.block_until_ready(out)
    ref = _reference(x, w1, b1, w2, b2)
    assert out.shape == (batch, 1)
    assert jnp.allclose(out, ref, atol=1e-5, rtol=1e-5)

    # Larger, non-tile-aligned batch: exercises the multi-block main path + the tail path.
    n_big = 20000
    x_big = jax.random.normal(k_big, (n_big, channels, length), dtype=jnp.float32)
    out_big = jax.block_until_ready(wrapper_forward(x_big, w1, b1, w2, b2))
    ref_big = _reference(x_big, w1, b1, w2, b2)
    assert out_big.shape == (n_big, 1)
    assert jnp.allclose(out_big, ref_big, atol=1e-4, rtol=1e-4)

    print("KERNEL_OK")
</pallas_src>

<mosaic_0001>
module attributes {stable_mosaic.version = 11 : i64} {
  func.func @_mlp_diff_kernel(%arg0: i32, %arg1: memref<512x64xf32, #tpu.memory_space<vmem>>, %arg2: memref<32x64xf32, #tpu.memory_space<vmem>>, %arg3: memref<32x1xf32, #tpu.memory_space<vmem>>, %arg4: memref<32x1xf32, #tpu.memory_space<vmem>>, %arg5: memref<1x1xf32, #tpu.memory_space<vmem>>, %arg6: memref<1x512xf32, #tpu.memory_space<vmem>>) attributes {dimension_semantics = [#tpu.dimension_semantics<parallel>], iteration_bounds = array<i64: 1>, scalar_prefetch = 0 : i64, scratch_operands = 0 : i64, tpu.core_type = #tpu.core_type<tc>, window_params = [{transform_indices = @transform_0, window_bounds = array<i64: 512, 64>}, {pipeline_mode = #tpu.pipeline_mode<synchronous>, transform_indices = @transform_1, window_bounds = array<i64: 32, 64>}, {pipeline_mode = #tpu.pipeline_mode<synchronous>, transform_indices = @transform_2, window_bounds = array<i64: 32, 1>}, {pipeline_mode = #tpu.pipeline_mode<synchronous>, transform_indices = @transform_3, window_bounds = array<i64: 32, 1>}, {pipeline_mode = #tpu.pipeline_mode<synchronous>, transform_indices = @transform_4, window_bounds = array<i64: 1, 1>}, {transform_indices = @transform_5, window_bounds = array<i64: 1, 512>}]} {
    %c0 = arith.constant 0 : index
    %c0_0 = arith.constant 0 : index
    %0 = vector.load %arg2[%c0, %c0_0] : memref<32x64xf32, #tpu.memory_space<vmem>>, vector<32x64xf32>
    %c0_1 = arith.constant 0 : index
    %c0_2 = arith.constant 0 : index
    %1 = vector.load %arg3[%c0_1, %c0_2] : memref<32x1xf32, #tpu.memory_space<vmem>>, vector<32x1xf32>
    %c0_3 = arith.constant 0 : index
    %c0_4 = arith.constant 0 : index
    %2 = vector.load %arg4[%c0_3, %c0_4] : memref<32x1xf32, #tpu.memory_space<vmem>>, vector<32x1xf32>
    %c0_5 = arith.constant 0 : index
    %c0_6 = arith.constant 0 : index
    %3 = vector.load %arg5[%c0_5, %c0_6] : memref<1x1xf32, #tpu.memory_space<vmem>>, vector<1x1xf32>
    %c0_i32 = arith.constant 0 : i32
    %c512_i32 = arith.constant 512 : i32
    %4 = arith.muli %c0_i32, %c512_i32 : i32
    %5 = tpu.assume_multiple %4, 512 : i32
    %6 = arith.index_cast %5 : i32 to index
    %c0_7 = arith.constant 0 : index
    %7 = vector.load %arg1[%6, %c0_7] : memref<512x64xf32, #tpu.memory_space<vmem>>, vector<512x64xf32>
    %cst = arith.constant dense<0.000000e+00> : vector<32x512xf32>
    %8 = tpu.matmul %0, %7, %cst {dimension_numbers = #tpu.dot_dimension_numbers<[1], [1], [0], [0], [0, 0, 1, 0], [], []>} : vector<32x64xf32>, vector<512x64xf32>, vector<32x512xf32> -> vector<32x512xf32>
    %9 = vector.broadcast %1 : vector<32x1xf32> to vector<32x512xf32>
    %10 = arith.addf %8, %9 : vector<32x512xf32>
    %cst_8 = arith.constant 0.000000e+00 : f32
    %11 = vector.broadcast %cst_8 : f32 to vector<32x512xf32>
    %12 = arith.maximumf %10, %11 : vector<32x512xf32>
    %13 = vector.broadcast %2 : vector<32x1xf32> to vector<32x512xf32>
    %14 = arith.mulf %13, %12 : vector<32x512xf32>
    %cst_9 = arith.constant dense<0.000000e+00> : vector<512xf32>
    %15 = vector.multi_reduction <add>, %14, %cst_9 [0] : vector<32x512xf32> to vector<512xf32>
    %16 = vector.shape_cast %15 : vector<512xf32> to vector<1x512xf32>
    %17 = vector.broadcast %3 : vector<1x1xf32> to vector<1x512xf32>
    %18 = arith.addf %16, %17 : vector<1x512xf32>
    %19 = arith.index_cast %c0_i32 : i32 to index
    %c0_10 = arith.constant 0 : index
    %20 = vector.load %arg6[%19, %c0_10] : memref<1x512xf32, #tpu.memory_space<vmem>>, vector<1x512xf32>
    tpu.vector_store %arg6[%19, %c0_10], %18 {strides = array<i32>} : memref<1x512xf32, #tpu.memory_space<vmem>>, vector<1x512xf32>,
    %c1_i32 = arith.constant 1 : i32
    return
  }
  func.func @transform_0(%arg0: i32) -> (i32, i32) {
    %c0_i32 = arith.constant 0 : i32
    %c0_i32_0 = arith.constant 0 : i32
    return %arg0, %c0_i32 : i32, i32
  }
  func.func @transform_1(%arg0: i32) -> (i32, i32) {
    %c0_i32 = arith.constant 0 : i32
    %c0_i32_0 = arith.constant 0 : i32
    %c0_i32_1 = arith.constant 0 : i32
    return %c0_i32, %c0_i32_0 : i32, i32
  }
  func.func @transform_2(%arg0: i32) -> (i32, i32) {
    %c0_i32 = arith.constant 0 : i32
    %c0_i32_0 = arith.constant 0 : i32
    %c0_i32_1 = arith.constant 0 : i32
    return %c0_i32, %c0_i32_0 : i32, i32
  }
  func.func @transform_3(%arg0: i32) -> (i32, i32) {
    %c0_i32 = arith.constant 0 : i32
    %c0_i32_0 = arith.constant 0 : i32
    %c0_i32_1 = arith.constant 0 : i32
    return %c0_i32, %c0_i32_0 : i32, i32
  }
  func.func @transform_4(%arg0: i32) -> (i32, i32) {
    %c0_i32 = arith.constant 0 : i32
    %c0_i32_0 = arith.constant 0 : i32
    %c0_i32_1 = arith.constant 0 : i32
    return %c0_i32, %c0_i32_0 : i32, i32
  }
  func.func @transform_5(%arg0: i32) -> (i32, i32) {
    %c0_i32 = arith.constant 0 : i32
    %c0_i32_0 = arith.constant 0 : i32
    return %arg0, %c0_i32 : i32, i32
  }
}

</mosaic_0001>

<llo_original>
// kernel: tpu_custom_call.1
$region0: #{tpu_custom_call.1}
  #allocation0 [shape = 'u32[]', space=smem, size = 0x4, offset = 0x4, fixed_abs, tag = 'smem constant byte address 0x4 - core index']
  #allocation1 [shape = 'u32[144,128]{1,0:T(1,128)}', space=vmem, size = 0x12000, scoped, tag = 'internal scratch']
  #allocation2 [shape = 'f32[1,1]{1,0:T(1,128)S(1)}', space=vmem, size = 0x200, scoped, tag = 'scoped memory for tpu_custom_call.1']
  %s0 = inlined_call_operand.vmem [shape: f32[512,64], index: 0, kind: input, shape index: {}]
  %s1 = inlined_call_operand.vmem [shape: f32[32,64], index: 1, kind: input, shape index: {}]
  %s2 = inlined_call_operand.vmem [shape: f32[32,1], index: 2, kind: input, shape index: {}]
  %s3 = inlined_call_operand.vmem [shape: f32[32,1], index: 3, kind: input, shape index: {}]
  %s4 = inlined_call_operand.<no memory space> [shape: f32[1,1], index: 4, kind: input, shape index: {}]
  %s5 = inlined_call_operand.hbm [shape: f32[1,512], index: 5, kind: output, shape index: {}]
  %s6 = sld [smem:[#allocation0]]
  $region30: #{tpu_custom_call.1} parent=0
    _
  %s8 = ssub.s32 1, %s6
  %s9 = scalar_select 0, %s8, %s6
  %v10 = vstv %s4
  %11 = vst [vmem:[#allocation2] sm:$0x1] %v10
  $region1: #{tpu_custom_call.1} parent=0
    #allocation3 [shape = 'u8[2048]{0}', space=vmem, size = 0x800, scoped, tag = 'output window, operand 0, single buffered']
    #allocation4 [shape = 's32[1]{0}', space=sflag, size = 0x4, scoped, tag = 'scoped memory for tpu_custom_call.1']
    %12 = vsyncpa [#allocation4], 0
    // Predicated region
    $region2: #{tpu_custom_call.1} parent=1 // pred_check
      _
    $region3: #{tpu_custom_call.1} parent=1 // pred_check_branch
      %14 = sbr.rel (0) target = $region5
    $region4: #{tpu_custom_call.1} parent=1 // pred_region
      _
    $region5: #{tpu_custom_call.1} parent=1 // pred_fallthru
      _
    // Predicated region
    $region6: #{tpu_custom_call.1} parent=1 // pred_check
      _
    $region7: #{tpu_custom_call.1} parent=1 // pred_check_branch
      %16 = sbr.rel (0) target = $region9
    $region8: #{tpu_custom_call.1} parent=1 // pred_region
      _
    $region9: #{tpu_custom_call.1} parent=1 // pred_fallthru
      _
    // Predicated region
    $region10: #{tpu_custom_call.1} parent=1 // pred_check
      _
    $region11: #{tpu_custom_call.1} parent=1 // pred_check_branch
      %18 = sbr.rel (0) target = $region13
    $region12: #{tpu_custom_call.1} parent=1 // pred_region
      _
    $region13: #{tpu_custom_call.1} parent=1 // pred_fallthru
      _
    // Predicated region
    $region14: #{tpu_custom_call.1} parent=1 // pred_check
      _
    $region15: #{tpu_custom_call.1} parent=1 // pred_check_branch
      %20 = sbr.rel (0) target = $region17
    $region16: #{tpu_custom_call.1} parent=1 // pred_region
      _
    $region17: #{tpu_custom_call.1} parent=1 // pred_fallthru
      _
    // Predicated region
    $region18: #{tpu_custom_call.1} parent=1 // pred_check
      _
    $region19: #{tpu_custom_call.1} parent=1 // pred_check_branch
      %22 = sbr.rel (0) target = $region21
    $region20: #{tpu_custom_call.1} parent=1 // pred_region
      _
    $region21: #{tpu_custom_call.1} parent=1 // pred_fallthru
      _
    %v23 = vld [vmem:[%s1] sm:$0xff]
    %v24 = vld [vmem:[%s1 + $0x8] sm:$0xff]
    %v25 = vld [vmem:[%s1 + $0x10] sm:$0xff]
    %v26 = vld [vmem:[%s1 + $0x18] sm:$0xff]
    %v27 = vld [vmem:[%s2] sm:$0xff]
    %v28 = vld [vmem:[%s2 + $0x8] sm:$0xff]
    %v29 = vld [vmem:[%s2 + $0x10] sm:$0xff]
    %v30 = vld [vmem:[%s2 + $0x18] sm:$0xff]
    %v31 = vld [vmem:[%s3] sm:$0xff]
    %v32 = vld [vmem:[%s3 + $0x8] sm:$0xff]
    %v33 = vld [vmem:[%s3 + $0x10] sm:$0xff]
    %v34 = vld [vmem:[%s3 + $0x18] sm:$0xff]
    %v35 = vld [vmem:[#allocation2] sm:$0x1]
    %v36 = vld [vmem:[%s0] sm:$0xff]
    %v37 = vld [vmem:[%s0 + $0x8] sm:$0xff]
    %v38 = vld [vmem:[%s0 + $0x10] sm:$0xff]
    %v39 = vld [vmem:[%s0 + $0x18] sm:$0xff]
    %v40 = vld [vmem:[%s0 + $0x20] sm:$0xff]
    %v41 = vld [vmem:[%s0 + $0x28] sm:$0xff]
    %v42 = vld [vmem:[%s0 + $0x30] sm:$0xff]
    %v43 = vld [vmem:[%s0 + $0x38] sm:$0xff]
    %v44 = vld [vmem:[%s0 + $0x40] sm:$0xff]
    %v45 = vld [vmem:[%s0 + $0x48] sm:$0xff]
    %v46 = vld [vmem:[%s0 + $0x50] sm:$0xff]
    %v47 = vld [vmem:[%s0 + $0x58] sm:$0xff]
    %v48 = vld [vmem:[%s0 + $0x60] sm:$0xff]
    %v49 = vld [vmem:[%s0 + $0x68] sm:$0xff]
    %v50 = vld [vmem:[%s0 + $0x70] sm:$0xff]
    %v51 = vld [vmem:[%s0 + $0x78] sm:$0xff]
    %v52 = vld [vmem:[%s0 + $0x80] sm:$0xff]
    %v53 = vld [vmem:[%s0 + $0x88] sm:$0xff]
    %v54 = vld [vmem:[%s0 + $0x90] sm:$0xff]
    %v55 = vld [vmem:[%s0 + $0x98] sm:$0xff]
    %v56 = vld [vmem:[%s0 + $0xa0] sm:$0xff]
    %v57 = vld [vmem:[%s0 + $0xa8] sm:$0xff]
    %v58 = vld [vmem:[%s0 + $0xb0] sm:$0xff]
    %v59 = vld [vmem:[%s0 + $0xb8] sm:$0xff]
    %v60 = vld [vmem:[%s0 + $0xc0] sm:$0xff]
    %v61 = vld [vmem:[%s0 + $0xc8] sm:$0xff]
    %v62 = vld [vmem:[%s0 + $0xd0] sm:$0xff]
    %v63 = vld [vmem:[%s0 + $0xd8] sm:$0xff]
    %v64 = vld [vmem:[%s0 + $0xe0] sm:$0xff]
    %v65 = vld [vmem:[%s0 + $0xe8] sm:$0xff]
    %v66 = vld [vmem:[%s0 + $0xf0] sm:$0xff]
    %v67 = vld [vmem:[%s0 + $0xf8] sm:$0xff]
    %v68 = vld [vmem:[%s0 + $0x100] sm:$0xff]
    %v69 = vld [vmem:[%s0 + $0x108] sm:$0xff]
    %v70 = vld [vmem:[%s0 + $0x110] sm:$0xff]
    %v71 = vld [vmem:[%s0 + $0x118] sm:$0xff]
    %v72 = vld [vmem:[%s0 + $0x120] sm:$0xff]
    %v73 = vld [vmem:[%s0 + $0x128] sm:$0xff]
    %v74 = vld [vmem:[%s0 + $0x130] sm:$0xff]
    %v75 = vld [vmem:[%s0 + $0x138] sm:$0xff]
    %v76 = vld [vmem:[%s0 + $0x140] sm:$0xff]
    %v77 = vld [vmem:[%s0 + $0x148] sm:$0xff]
    %v78 = vld [vmem:[%s0 + $0x150] sm:$0xff]
    %v79 = vld [vmem:[%s0 + $0x158] sm:$0xff]
    %v80 = vld [vmem:[%s0 + $0x160] sm:$0xff]
    %v81 = vld [vmem:[%s0 + $0x168] sm:$0xff]
    %v82 = vld [vmem:[%s0 + $0x170] sm:$0xff]
    %v83 = vld [vmem:[%s0 + $0x178] sm:$0xff]
    %v84 = vld [vmem:[%s0 + $0x180] sm:$0xff]
    %v85 = vld [vmem:[%s0 + $0x188] sm:$0xff]
    %v86 = vld [vmem:[%s0 + $0x190] sm:$0xff]
    %v87 = vld [vmem:[%s0 + $0x198] sm:$0xff]
    %v88 = vld [vmem:[%s0 + $0x1a0] sm:$0xff]
    %v89 = vld [vmem:[%s0 + $0x1a8] sm:$0xff]
    %v90 = vld [vmem:[%s0 + $0x1b0] sm:$0xff]
    %v91 = vld [vmem:[%s0 + $0x1b8] sm:$0xff]
    %v92 = vld [vmem:[%s0 + $0x1c0] sm:$0xff]
    %v93 = vld [vmem:[%s0 + $0x1c8] sm:$0xff]
    %v94 = vld [vmem:[%s0 + $0x1d0] sm:$0xff]
    %v95 = vld [vmem:[%s0 + $0x1d8] sm:$0xff]
    %v96 = vld [vmem:[%s0 + $0x1e0] sm:$0xff]
    %v97 = vld [vmem:[%s0 + $0x1e8] sm:$0xff]
    %v98 = vld [vmem:[%s0 + $0x1f0] sm:$0xff]
    %v99 = vld [vmem:[%s0 + $0x1f8] sm:$0xff]
    %101 = vset.pattern.permute.xlu0 0
    %102 = vperm.xlu0 %101, %v27
    %v103 = vpop.permute.xlu0 %102
    %106 = vset.pattern.permute.xlu0 0
    %107 = vperm.xlu0 %106, %v28
    %v108 = vpop.permute.xlu0 %107
    %111 = vset.pattern.permute.xlu0 0
    %112 = vperm.xlu0 %111, %v29
    %v113 = vpop.permute.xlu0 %112
    %116 = vset.pattern.permute.xlu0 0
    %117 = vperm.xlu0 %116, %v30
    %v118 = vpop.permute.xlu0 %117
    %vm120 = vcmask 523264
    %v122 = vsel %vm120, %v23, 0
    %v125 = vsel %vm120, %v24, 0
    %v128 = vsel %vm120, %v25, 0
    %v131 = vsel %vm120, %v26, 0
    %v134 = vsel %vm120, %v36, 0
    %v137 = vsel %vm120, %v37, 0
    %v140 = vsel %vm120, %v38, 0
    %v143 = vsel %vm120, %v39, 0
    %v146 = vsel %vm120, %v40, 0
    %v149 = vsel %vm120, %v41, 0
    %v152 = vsel %vm120, %v42, 0
    %v155 = vsel %vm120, %v43, 0
    %v158 = vsel %vm120, %v44, 0
    %v161 = vsel %vm120, %v45, 0
    %v164 = vsel %vm120, %v46, 0
    %v167 = vsel %vm120, %v47, 0
    %v170 = vsel %vm120, %v48, 0
    %v173 = vsel %vm120, %v49, 0
    %v176 = vsel %vm120, %v50, 0
    %v179 = vsel %vm120, %v51, 0
    %v182 = vsel %vm120, %v52, 0
    %v185 = vsel %vm120, %v53, 0
    %v188 = vsel %vm120, %v54, 0
    %v191 = vsel %vm120, %v55, 0
    %v194 = vsel %vm120, %v56, 0
    %v197 = vsel %vm120, %v57, 0
    %v200 = vsel %vm120, %v58, 0
    %v203 = vsel %vm120, %v59, 0
    %v206 = vsel %vm120, %v60, 0
    %v209 = vsel %vm120, %v61, 0
    %v212 = vsel %vm120, %v62, 0
    %v215 = vsel %vm120, %v63, 0
    %v218 = vsel %vm120, %v64, 0
    %v221 = vsel %vm120, %v65, 0
    %v224 = vsel %vm120, %v66, 0
    %v227 = vsel %vm120, %v67, 0
    %v230 = vsel %vm120, %v68, 0
    %v233 = vsel %vm120, %v69, 0
    %v236 = vsel %vm120, %v70, 0
    %v239 = vsel %vm120, %v71, 0
    %v242 = vsel %vm120, %v72, 0
    %v245 = vsel %vm120, %v73, 0
    %v248 = vsel %vm120, %v74, 0
    %v251 = vsel %vm120, %v75, 0
    %v254 = vsel %vm120, %v76, 0
    %v257 = vsel %vm120, %v77, 0
    %v260 = vsel %vm120, %v78, 0
    %v263 = vsel %vm120, %v79, 0
    %v266 = vsel %vm120, %v80, 0
    %v269 = vsel %vm120, %v81, 0
    %v272 = vsel %vm120, %v82, 0
    %v275 = vsel %vm120, %v83, 0
    %v278 = vsel %vm120, %v84, 0
    %v281 = vsel %vm120, %v85, 0
    %v284 = vsel %vm120, %v86, 0
    %v287 = vsel %vm120, %v87, 0
    %v290 = vsel %vm120, %v88, 0
    %v293 = vsel %vm120, %v89, 0
    %v296 = vsel %vm120, %v90, 0
    %v299 = vsel %vm120, %v91, 0
    %v302 = vsel %vm120, %v92, 0
    %v305 = vsel %vm120, %v93, 0
    %v308 = vsel %vm120, %v94, 0
    %v311 = vsel %vm120, %v95, 0
    %v314 = vsel %vm120, %v96, 0
    %v317 = vsel %vm120, %v97, 0
    %v320 = vsel %vm120, %v98, 0
    %v323 = vsel %vm120, %v99, 0
    %325 = vmatprep.subr.mxu0 0.0
    %326 = vmatpush1.xpose.msra.mxu0 %v179
    %327 = vmatprep.subr.mxu0 0.0
    %328 = vmatpush1.xpose.msra.mxu0 %v176
    %329 = vmatprep.subr.mxu0 0.0
    %330 = vmatpush1.xpose.msra.mxu0 %v173
    %331 = vmatprep.subr.mxu0 0.0
    %332 = vmatpush1.xpose.msra.mxu0 %v170
    %333 = vmatprep.subr.mxu0 0.0
    %334 = vmatpush1.xpose.msra.mxu0 %v167
    %335 = vmatprep.subr.mxu0 0.0
    %336 = vmatpush1.xpose.msra.mxu0 %v164
    %337 = vmatprep.subr.mxu0 0.0
    %338 = vmatpush1.xpose.msra.mxu0 %v161
    %339 = vmatprep.subr.mxu0 0.0
    %340 = vmatpush1.xpose.msra.mxu0 %v158
    %341 = vmatprep.subr.mxu0 0.0
    %342 = vmatpush1.xpose.msra.mxu0 %v155
    %343 = vmatprep.subr.mxu0 0.0
    %344 = vmatpush1.xpose.msra.mxu0 %v152
    %345 = vmatprep.subr.mxu0 0.0
    %346 = vmatpush1.xpose.msra.mxu0 %v149
    %347 = vmatprep.subr.mxu0 0.0
    %348 = vmatpush1.xpose.msra.mxu0 %v146
    %349 = vmatprep.subr.mxu0 0.0
    %350 = vmatpush1.xpose.msra.mxu0 %v143
    %351 = vmatprep.subr.mxu0 0.0
    %352 = vmatpush1.xpose.msra.mxu0 %v140
    %353 = vmatprep.subr.mxu0 0.0
    %354 = vmatpush1.xpose.msra.mxu0 %v137
    %355 = vmatprep.subr.mxu0 0.0
    %356 = vmatpush1.xpose.msra.mxu0 %v134
    %357 = vmatprep.subr.mxu0 0.0
    %358 = vmatpush2.xpose.msra.mxu0 %v227
    %359 = vmatprep.subr.mxu0 0.0
    %360 = vmatpush2.xpose.msra.mxu0 %v224
    %361 = vmatprep.subr.mxu0 0.0
    %362 = vmatpush2.xpose.msra.mxu0 %v221
    %363 = vmatprep.subr.mxu0 0.0
    %364 = vmatpush2.xpose.msra.mxu0 %v218
    %365 = vmatprep.subr.mxu0 0.0
    %366 = vmatpush2.xpose.msra.mxu0 %v215
    %367 = vmatprep.subr.mxu0 0.0
    %368 = vmatpush2.xpose.msra.mxu0 %v212
    %369 = vmatprep.subr.mxu0 0.0
    %370 = vmatpush2.xpose.msra.mxu0 %v209
    %371 = vmatprep.subr.mxu0 0.0
    %372 = vmatpush2.xpose.msra.mxu0 %v206
    %373 = vmatprep.subr.mxu0 0.0
    %374 = vmatpush2.xpose.msra.mxu0 %v203
    %375 = vmatprep.subr.mxu0 0.0
    %376 = vmatpush2.xpose.msra.mxu0 %v200
    %377 = vmatprep.subr.mxu0 0.0
    %378 = vmatpush2.xpose.msra.mxu0 %v197
    %379 = vmatprep.subr.mxu0 0.0
    %380 = vmatpush2.xpose.msra.mxu0 %v194
    %381 = vmatprep.subr.mxu0 0.0
    %382 = vmatpush2.xpose.msra.mxu0 %v191
    %383 = vmatprep.subr.mxu0 0.0
    %384 = vmatpush2.xpose.msra.mxu0 %v188
    %385 = vmatprep.subr.mxu0 0.0
    %386 = vmatpush2.xpose.msra.mxu0 %v185
    %387 = vmatprep.subr.mxu0 0.0
    %388 = vmatpush2.xpose.msra.mxu0 %v182
    %389 = vmatprep.mubr.f32.mxu0 0.0
    %390 = vmatmul.mubr.f32.gmra.mxu0 %v122
    %v391 = vpop.f32.mrf.mxu0
    %v392 = vadd.f32 %v103, %v391
    %v393 = vpop.f32.mrf.mxu0
    %v394 = vadd.f32 %v103, %v393
    %395 = vmatprep.mubr.f32.mxu0 0.0
    %396 = vmatmul.mubr.f32.gmra.mxu0 %v125
    %v397 = vpop.f32.mrf.mxu0
    %v398 = vadd.f32 %v108, %v397
    %v399 = vpop.f32.mrf.mxu0
    %v400 = vadd.f32 %v108, %v399
    %401 = vmatprep.mubr.f32.mxu0 0.0
    %402 = vmatmul.mubr.f32.gmra.mxu0 %v128
    %v403 = vpop.f32.mrf.mxu0
    %v404 = vadd.f32 %v113, %v403
    %v405 = vpop.f32.mrf.mxu0
    %v406 = vadd.f32 %v113, %v405
    %407 = vmatprep.mubr.f32.mxu0 0.0
    %408 = vmatmul.mubr.f32.gmra.mxu0 %v131
    %v409 = vpop.f32.mrf.mxu0
    %v410 = vadd.f32 %v118, %v409
    %v411 = vpop.f32.mrf.mxu0
    %v412 = vadd.f32 %v118, %v411
    %413 = vdwg.mxu0
    %414 = vmatprep.subr.mxu0 0.0
    %415 = vmatpush1.xpose.msra.mxu0 %v275
    %416 = vmatprep.subr.mxu0 0.0
    %417 = vmatpush1.xpose.msra.mxu0 %v272
    %418 = vmatprep.subr.mxu0 0.0
    %419 = vmatpush1.xpose.msra.mxu0 %v269
    %420 = vmatprep.subr.mxu0 0.0
    %421 = vmatpush1.xpose.msra.mxu0 %v266
    %422 = vmatprep.subr.mxu0 0.0
    %423 = vmatpush1.xpose.msra.mxu0 %v263
    %424 = vmatprep.subr.mxu0 0.0
    %425 = vmatpush1.xpose.msra.mxu0 %v260
    %426 = vmatprep.subr.mxu0 0.0
    %427 = vmatpush1.xpose.msra.mxu0 %v257
    %428 = vmatprep.subr.mxu0 0.0
    %429 = vmatpush1.xpose.msra.mxu0 %v254
    %430 = vmatprep.subr.mxu0 0.0
    %431 = vmatpush1.xpose.msra.mxu0 %v251
    %432 = vmatprep.subr.mxu0 0.0
    %433 = vmatpush1.xpose.msra.mxu0 %v248
    %434 = vmatprep.subr.mxu0 0.0
    %435 = vmatpush1.xpose.msra.mxu0 %v245
    %436 = vmatprep.subr.mxu0 0.0
    %437 = vmatpush1.xpose.msra.mxu0 %v242
    %438 = vmatprep.subr.mxu0 0.0
    %439 = vmatpush1.xpose.msra.mxu0 %v239
    %440 = vmatprep.subr.mxu0 0.0
    %441 = vmatpush1.xpose.msra.mxu0 %v236
    %442 = vmatprep.subr.mxu0 0.0
    %443 = vmatpush1.xpose.msra.mxu0 %v233
    %444 = vmatprep.subr.mxu0 0.0
    %445 = vmatpush1.xpose.msra.mxu0 %v230
    %446 = vmatprep.subr.mxu0 0.0
    %447 = vmatpush2.xpose.msra.mxu0 %v323
    %448 = vmatprep.subr.mxu0 0.0
    %449 = vmatpush2.xpose.msra.mxu0 %v320
    %450 = vmatprep.subr.mxu0 0.0
    %451 = vmatpush2.xpose.msra.mxu0 %v317
    %452 = vmatprep.subr.mxu0 0.0
    %453 = vmatpush2.xpose.msra.mxu0 %v314
    %454 = vmatprep.subr.mxu0 0.0
    %455 = vmatpush2.xpose.msra.mxu0 %v311
    %456 = vmatprep.subr.mxu0 0.0
    %457 = vmatpush2.xpose.msra.mxu0 %v308
    %458 = vmatprep.subr.mxu0 0.0
    %459 = vmatpush2.xpose.msra.mxu0 %v305
    %460 = vmatprep.subr.mxu0 0.0
    %461 = vmatpush2.xpose.msra.mxu0 %v302
    %462 = vmatprep.subr.mxu0 0.0
    %463 = vmatpush2.xpose.msra.mxu0 %v299
    %464 = vmatprep.subr.mxu0 0.0
    %465 = vmatpush2.xpose.msra.mxu0 %v296
    %466 = vmatprep.subr.mxu0 0.0
    %467 = vmatpush2.xpose.msra.mxu0 %v293
    %468 = vmatprep.subr.mxu0 0.0
    %469 = vmatpush2.xpose.msra.mxu0 %v290
    %470 = vmatprep.subr.mxu0 0.0
    %471 = vmatpush2.xpose.msra.mxu0 %v287
    %472 = vmatprep.subr.mxu0 0.0
    %473 = vmatpush2.xpose.msra.mxu0 %v284
    %474 = vmatprep.subr.mxu0 0.0
    %475 = vmatpush2.xpose.msra.mxu0 %v281
    %476 = vmatprep.subr.mxu0 0.0
    %477 = vmatpush2.xpose.msra.mxu0 %v278
    %478 = vmatprep.mubr.f32.mxu0 0.0
    %479 = vmatmul.mubr.f32.gmra.mxu0 %v122
    %v480 = vpop.f32.mrf.mxu0
    %v481 = vadd.f32 %v103, %v480
    %v482 = vpop.f32.mrf.mxu0
    %v483 = vadd.f32 %v103, %v482
    %484 = vmatprep.mubr.f32.mxu0 0.0
    %485 = vmatmul.mubr.f32.gmra.mxu0 %v125
    %v486 = vpop.f32.mrf.mxu0
    %v487 = vadd.f32 %v108, %v486
    %v488 = vpop.f32.mrf.mxu0
    %v489 = vadd.f32 %v108, %v488
    %490 = vmatprep.mubr.f32.mxu0 0.0
    %491 = vmatmul.mubr.f32.gmra.mxu0 %v128
    %v492 = vpop.f32.mrf.mxu0
    %v493 = vadd.f32 %v113, %v492
    %v494 = vpop.f32.mrf.mxu0
    %v495 = vadd.f32 %v113, %v494
    %496 = vmatprep.mubr.f32.mxu0 0.0
    %497 = vmatmul.mubr.f32.gmra.mxu0 %v131
    %v498 = vpop.f32.mrf.mxu0
    %v499 = vadd.f32 %v118, %v498
    %v500 = vpop.f32.mrf.mxu0
    %v501 = vadd.f32 %v118, %v500
    %502 = vdwg.mxu0
    %v503 = vmax.f32 %v392, 0.0
    %v504 = vmax.f32 %v394, 0.0
    %v505 = vmax.f32 %v481, 0.0
    %v506 = vmax.f32 %v483, 0.0
    %v507 = vmax.f32 %v398, 0.0
    %v508 = vmax.f32 %v400, 0.0
    %v509 = vmax.f32 %v487, 0.0
    %v510 = vmax.f32 %v489, 0.0
    %v511 = vmax.f32 %v404, 0.0
    %v512 = vmax.f32 %v406, 0.0
    %v513 = vmax.f32 %v493, 0.0
    %v514 = vmax.f32 %v495, 0.0
    %v515 = vmax.f32 %v410, 0.0
    %v516 = vmax.f32 %v412, 0.0
    %v517 = vmax.f32 %v499, 0.0
    %v518 = vmax.f32 %v501, 0.0
    %520 = vset.pattern.permute.xlu0 0
    %521 = vperm.xlu0 %520, %v31
    %v522 = vpop.permute.xlu0 %521
    %525 = vset.pattern.permute.xlu0 0
    %526 = vperm.xlu0 %525, %v32
    %v527 = vpop.permute.xlu0 %526
    %530 = vset.pattern.permute.xlu0 0
    %531 = vperm.xlu0 %530, %v33
    %v532 = vpop.permute.xlu0 %531
    %535 = vset.pattern.permute.xlu0 0
    %536 = vperm.xlu0 %535, %v34
    %v537 = vpop.permute.xlu0 %536
    %v539 = vmul.f32 %v522, %v503
    %v540 = vmul.f32 %v522, %v504
    %v541 = vmul.f32 %v522, %v505
    %v542 = vmul.f32 %v522, %v506
    %v543 = vmul.f32 %v527, %v507
    %v544 = vmul.f32 %v527, %v508
    %v545 = vmul.f32 %v527, %v509
    %v546 = vmul.f32 %v527, %v510
    %v547 = vmul.f32 %v532, %v511
    %v548 = vmul.f32 %v532, %v512
    %v549 = vmul.f32 %v532, %v513
    %v550 = vmul.f32 %v532, %v514
    %v551 = vmul.f32 %v537, %v515
    %v552 = vmul.f32 %v537, %v516
    %v553 = vmul.f32 %v537, %v517
    %v554 = vmul.f32 %v537, %v518
    %v555 = vadd.f32 %v539, %v543
    %v556 = vadd.f32 %v555, %v547
    %v557 = vadd.f32 %v556, %v551
    %v558 = vrot.slane %v557, 4
    %v559 = vadd.f32 %v557, %v558
    %v560 = vrot.slane %v559, 2
    %v561 = vadd.f32 %v559, %v560
    %v562 = vrot.slane %v561, 1
    %v563 = vadd.f32 %v561, %v562
    %v564 = vadd.f32 %v540, %v544
    %v565 = vadd.f32 %v564, %v548
    %v566 = vadd.f32 %v565, %v552
    %v567 = vrot.slane %v566, 4
    %v568 = vadd.f32 %v566, %v567
    %v569 = vrot.slane %v568, 2
    %v570 = vadd.f32 %v568, %v569
    %v571 = vrot.slane %v570, 1
    %v572 = vadd.f32 %v570, %v571
    %v573 = vadd.f32 %v541, %v545
    %v574 = vadd.f32 %v573, %v549
    %v575 = vadd.f32 %v574, %v553
    %v576 = vrot.slane %v575, 4
    %v577 = vadd.f32 %v575, %v576
    %v578 = vrot.slane %v577, 2
    %v579 = vadd.f32 %v577, %v578
    %v580 = vrot.slane %v579, 1
    %v581 = vadd.f32 %v579, %v580
    %v582 = vadd.f32 %v542, %v546
    %v583 = vadd.f32 %v582, %v550
    %v584 = vadd.f32 %v583, %v554
    %v585 = vrot.slane %v584, 4
    %v586 = vadd.f32 %v584, %v585
    %v587 = vrot.slane %v586, 2
    %v588 = vadd.f32 %v586, %v587
    %v589 = vrot.slane %v588, 1
    %v590 = vadd.f32 %v588, %v589
    %592 = vset.pattern.permute.xlu0 0
    %593 = vperm.xlu0 %592, %v35
    %v594 = vpop.permute.xlu0 %593
    %v596 = vlaneseq
    %v597 = vshrl.u32 %v596, 7
    %v598 = vsub.s32 0, %v597
    %v599 = vrot.slane %v594, %v598
    %v600 = vadd.f32 %v563, %v599
    %v601 = vadd.f32 %v572, %v599
    %v602 = vadd.f32 %v581, %v599
    %v603 = vadd.f32 %v590, %v599
    %v608 = vcombine.low %v600, %v601
    %v609 = vcombine.low %v602, %v603
    %v611 = vunpack.c.l.s4 1966171168
    %v612 = vunpack.c.0.s8 %v611
    %v613 = vlaneseq
    %v614 = vshrl.u32 %v613, 7
    %v615 = vsub.s32 %v612, %v614
    %v616 = vrot.slane %v608, %v615
    %v618 = vunpack.c.l.s4 1966171168
    %v619 = vunpack.c.0.s8 %v618
    %v620 = vlaneseq
    %v621 = vshrl.u32 %v620, 7
    %v622 = vsub.s32 %v619, %v621
    %v623 = vrot.slane %v609, %v622
    %v624 = vcombine.low %v616, %v623
    %v626 = vunpack.c.l.s4 1966171168
    %v627 = vunpack.c.0.s8 %v626
    %v628 = vlaneseq
    %v629 = vshrl.u32 %v628, 7
    %v630 = vsub.s32 %v627, %v629
    %v631 = vrot.slane %v624, %v630
    %v633 = vlaneseq
    %vm634 = vcmp.ge.s32.totalorder %v633, 0
    %vm635 = vcmp.lt.s32.totalorder %v633, 512
    %vm636 = vmand %vm634, %vm635
    %637 = vst.msk [vmem:[#allocation3] sm:$0xf] %vm636, %v631
    // Predicated region
    $region22: #{tpu_custom_call.1} parent=1 // pred_check
      _
    $region23: #{tpu_custom_call.1} parent=1 // pred_check_branch
      %639 = sbr.rel (0) target = $region25
    $region24: #{tpu_custom_call.1} parent=1 // pred_region
      %s641 = ssub.s32 64, 64
      %642 = vsyncadd [#allocation4], %s641
      %s644 = sshll.u32 [#allocation3], 4
      %s645 = int_to_ptr.vmem [resolvable:$true] %s644
      %647 = dma.vmem_to_hbm [thread:$0]  %s645, 64, %s5, [#allocation4]
    $region25: #{tpu_custom_call.1} parent=1 // pred_fallthru
      _
    // Predicated region
    $region26: #{tpu_custom_call.1} parent=1 // pred_check
      _
    $region27: #{tpu_custom_call.1} parent=1 // pred_check_branch
      %649 = sbr.rel (0) target = $region29
    $region28: #{tpu_custom_call.1} parent=1 // pred_region
      %650 = dma.done [#allocation4], 64
    $region29: #{tpu_custom_call.1} parent=1 // pred_fallthru
      _
    %651 = vsyncpa [#allocation4], 1

</llo_original>
